<compile_context>
chip_gen: v6e
topology: v6e:2x2x1
jax: 0.10.0
libtpu: 0.0.40
codegen_flags: <defaults>
</compile_context>

<pallas_src>
import jax
import jax.numpy as jnp
from jax.experimental import pallas as pl
from jax.experimental.pallas import tpu as pltpu


# ---------------------------------------------------------------------------
# Kernels
# ---------------------------------------------------------------------------
def _silu_gate_up(x, wgu):
    """One fused gate+up matmul for this intermediate slice; SiLU in fp32."""
    gu = jnp.dot(x, wgu, preferred_element_type=jnp.float32)    # [tm, 2*ti] f32
    ti = gu.shape[-1] // 2
    g = gu[:, :ti]
    u = gu[:, ti:]
    return (g * jax.nn.sigmoid(g)) * u                           # SiLU(g) * u


def _mlp_kernel_single(x_ref, wgu_ref, wd_ref, o_ref):
    """Single reduction step: no accumulator, no branches."""
    h = _silu_gate_up(x_ref[...], wgu_ref[...])
    o_ref[...] = jnp.dot(h.astype(wd_ref.dtype), wd_ref[...],
                         preferred_element_type=jnp.float32).astype(o_ref.dtype)


def _mlp_kernel_f32_out(x_ref, wgu_ref, wd_ref, o_ref):
    """fp32 output: accumulate directly into the resident output block."""
    k = pl.program_id(1)

    @pl.when(k == 0)
    def _():
        o_ref[...] = jnp.zeros_like(o_ref)

    h = _silu_gate_up(x_ref[...], wgu_ref[...])
    o_ref[...] += jnp.dot(h.astype(wd_ref.dtype), wd_ref[...],
                          preferred_element_type=jnp.float32)


def _mlp_kernel_acc(x_ref, wgu_ref, wd_ref, o_ref, acc_ref):
    """Non-fp32 output: fp32 VMEM accumulator, downcast on the last k step."""
    k = pl.program_id(1)

    @pl.when(k == 0)
    def _():
        acc_ref[...] = jnp.zeros_like(acc_ref)

    h = _silu_gate_up(x_ref[...], wgu_ref[...])
    acc_ref[...] += jnp.dot(h.astype(wd_ref.dtype), wd_ref[...],
                            preferred_element_type=jnp.float32)

    @pl.when(k == pl.num_programs(1) - 1)
    def _():
        o_ref[...] = acc_ref[...].astype(o_ref.dtype)


# ---------------------------------------------------------------------------
# Host-side helpers
# ---------------------------------------------------------------------------
_WEIGHT_VMEM_BUDGET = 40 << 20   # bytes for double-buffered weight blocks
_TOTAL_VMEM_CAP = 60 << 20       # keep under v7x's 64 MiB physical VMEM


def choose_intermediate_tile(intermediate_size, hidden_size=None,
                             compute_dtype=jnp.bfloat16):
    """Pick ti to fill the 256-wide MXU while keeping weight blocks in VMEM."""
    cands = [c for c in (1024, 512, 256, 128) if intermediate_size % c == 0]
    if not cands:
        return intermediate_size
    if hidden_size is None:
        return cands[0]
    itemsize = jnp.dtype(compute_dtype).itemsize
    for c in cands:
        # Double-buffered [H, 2*ti] (gate|up) and [ti, H] (down) blocks.
        w_bytes = 2 * (hidden_size * 2 * c + c * hidden_size) * itemsize
        if w_bytes <= _WEIGHT_VMEM_BUDGET:
            return c
    return cands[-1]


def prepare_llama_mlp_params(w_gate, w_up, w_down, *, ti, dtype=jnp.bfloat16):
    """One-time weight repack (done at load time, NOT per forward call).

    PyTorch nn.Linear stores (out_features, in_features).  We transpose to
    (in, out) layout, interleave gate/up per ti-wide slice so a single
    [H, 2*ti] weight block feeds one fused MXU pass, and cast to bf16.
    """
    I, H = w_gate.shape
    assert w_up.shape == (I, H) and w_down.shape == (H, I)
    assert I % ti == 0
    n_k = I // ti
    wg = w_gate.T.astype(dtype).reshape(H, n_k, ti)
    wu = w_up.T.astype(dtype).reshape(H, n_k, ti)
    # [H, n_k, 2*ti] -> [H, 2*I]; column block k holds [gate_k | up_k].
    wgu = jnp.concatenate([wg, wu], axis=-1).reshape(H, 2 * I)
    wd = w_down.T.astype(dtype)                                  # [I, H]
    return wgu, wd


def llama_mlp(x, wgu, wd, *, ti, tm=None, compute_dtype=jnp.bfloat16):
    """x: [B, S, H]; wgu: [H, 2*I] interleaved gate/up; wd: [I, H] (in, out).

    Returns [B, S, H] in x.dtype.
    """
    B, S, H = x.shape
    I, H2 = wd.shape
    assert H2 == H and wgu.shape == (H, 2 * I) and I % ti == 0

    M = B * S
    out_dtype = x.dtype
    f32_out = jnp.dtype(out_dtype) == jnp.dtype(jnp.float32)
    in_bytes = jnp.dtype(compute_dtype).itemsize
    out_bytes = jnp.dtype(out_dtype).itemsize

    if tm is None:
        # Large enough to amortize weight re-fetch (weight HBM traffic scales
        # as M/tm), while keeping >= 2 row tiles so the 'parallel' axis can
        # shard across v7x's two TensorCores.
        tm = int(min(256, max(8, pl.next_power_of_2(pl.cdiv(M, 2)))))

    def vmem_need(tm_):
        return (2 * (tm_ * H + H * 2 * ti + ti * H) * in_bytes   # dbl-buf inputs
                + 2 * tm_ * H * out_bytes                        # dbl-buf output
                + (0 if f32_out else tm_ * H * 4))               # fp32 scratch

    # Shrink the row tile until everything fits the scoped-VMEM cap.
    while tm > 8 and vmem_need(tm) > _TOTAL_VMEM_CAP:
        tm //= 2

    m_tiles = pl.cdiv(M, tm)
    M_pad = m_tiles * tm

    x2d = x.reshape(M, H).astype(compute_dtype)
    if M_pad != M:
        x2d = jnp.pad(x2d, ((0, M_pad - M), (0, 0)))

    n_k = I // ti
    grid = (m_tiles, n_k)

    if n_k == 1:
        kernel = _mlp_kernel_single
        scratch_shapes = []
    elif f32_out:
        kernel = _mlp_kernel_f32_out
        scratch_shapes = []
    else:
        kernel = _mlp_kernel_acc
        scratch_shapes = [pltpu.VMEM((tm, H), jnp.float32)]

    vmem_limit = int(min(max(2 * vmem_need(tm), 32 << 20), 64 << 20))

    out = pl.pallas_call(
        kernel,
        out_shape=jax.ShapeDtypeStruct((M_pad, H), out_dtype),
        grid_spec=pltpu.PrefetchScalarGridSpec(
            num_scalar_prefetch=0,
            grid=grid,
            in_specs=[
                pl.BlockSpec((tm, H), lambda m, k: (m, 0)),       # x row tile
                pl.BlockSpec((H, 2 * ti), lambda m, k: (0, k)),   # [gate_k|up_k]
                pl.BlockSpec((ti, H), lambda m, k: (k, 0)),       # down_k
            ],
            out_specs=pl.BlockSpec((tm, H), lambda m, k: (m, 0)),
            scratch_shapes=scratch_shapes,
        ),
        compiler_params=pltpu.CompilerParams(
            dimension_semantics=("parallel", "arbitrary"),
            vmem_limit_bytes=vmem_limit,
        ),
    )(x2d, wgu, wd)

    if M_pad != M:
        out = out[:M]
    return out.reshape(B, S, H)


# ---------------------------------------------------------------------------
# References
# ---------------------------------------------------------------------------
def _reference_mlp_f32(x, w_gate, w_up, w_down):
    """Pure-fp32 reference (PyTorch-layout weights)."""
    g = jnp.einsum("bsh,ih->bsi", x, w_gate)
    u = jnp.einsum("bsh,ih->bsi", x, w_up)
    h = jax.nn.silu(g) * u
    return jnp.einsum("bsi,hi->bsh", h, w_down)


def _reference_mlp_bf16(x, w_gate, w_up, w_down):
    """Reference matching the kernel's precision (bf16 operands, fp32 acc)."""
    B, S, H = x.shape
    xb = x.reshape(B * S, H).astype(jnp.bfloat16)
    g = jnp.dot(xb, w_gate.T.astype(jnp.bfloat16),
                preferred_element_type=jnp.float32)
    u = jnp.dot(xb, w_up.T.astype(jnp.bfloat16),
                preferred_element_type=jnp.float32)
    h = (g * jax.nn.sigmoid(g)) * u
    out = jnp.dot(h.astype(jnp.bfloat16), w_down.T.astype(jnp.bfloat16),
                  preferred_element_type=jnp.float32)
    return out.reshape(B, S, H).astype(x.dtype)


if __name__ == "__main__":
    # Small shapes consistent with the module:
    # batch=2, seq=8, hidden_size=128, intermediate_size=256, hidden_act="silu"
    B, S, H, I = 2, 8, 128, 256

    key = jax.random.PRNGKey(0)
    kx, kg, ku, kd = jax.random.split(key, 4)

    x = jax.random.normal(kx, (B, S, H), dtype=jnp.float32)
    # nn.Linear weight layout: (out_features, in_features), bias=False
    w_gate = jax.random.normal(kg, (I, H), dtype=jnp.float32) * 0.02
    w_up = jax.random.normal(ku, (I, H), dtype=jnp.float32) * 0.02
    w_down = jax.random.normal(kd, (H, I), dtype=jnp.float32) * 0.02

    # One-time weight repack (load time), then the forward pass.
    ti = choose_intermediate_tile(I, H)
    wgu, wd = prepare_llama_mlp_params(w_gate, w_up, w_down, ti=ti)

    out = llama_mlp(x, wgu, wd, ti=ti)
    out = jax.block_until_ready(out)
    assert out.shape == (B, S, H) and out.dtype == x.dtype

    # Check against a reference with matched mixed precision...
    ref_bf16 = _reference_mlp_bf16(x, w_gate, w_up, w_down)
    assert jnp.allclose(out, ref_bf16, atol=2e-4, rtol=2e-2), \
        "mismatch vs mixed-precision reference"

    # ...and loosely against the full-fp32 module semantics.
    ref_f32 = _reference_mlp_f32(x, w_gate, w_up, w_down)
    assert jnp.allclose(out, ref_f32, atol=2e-3, rtol=5e-2), \
        "mismatch vs fp32 reference"

    print("KERNEL_OK")
</pallas_src>

<mosaic_0001>
module attributes {stable_mosaic.version = 11 : i64} {
  func.func @_mlp_kernel_single(%arg0: i32, %arg1: i32, %arg2: memref<8x128xbf16, #tpu.memory_space<vmem>>, %arg3: memref<128x512xbf16, #tpu.memory_space<vmem>>, %arg4: memref<256x128xbf16, #tpu.memory_space<vmem>>, %arg5: memref<8x128xf32, #tpu.memory_space<vmem>>) attributes {dimension_semantics = [#tpu.dimension_semantics<parallel>, #tpu.dimension_semantics<arbitrary>], iteration_bounds = array<i64: 2, 1>, scalar_prefetch = 0 : i64, scratch_operands = 0 : i64, tpu.core_type = #tpu.core_type<tc>, window_params = [{transform_indices = @transform_0, window_bounds = array<i64: 8, 128>}, {transform_indices = @transform_1, window_bounds = array<i64: 128, 512>}, {transform_indices = @transform_2, window_bounds = array<i64: 256, 128>}, {transform_indices = @transform_3, window_bounds = array<i64: 8, 128>}]} {
    %c0 = arith.constant 0 : index
    %c0_0 = arith.constant 0 : index
    %0 = vector.load %arg2[%c0, %c0_0] : memref<8x128xbf16, #tpu.memory_space<vmem>>, vector<8x128xbf16>
    %c0_1 = arith.constant 0 : index
    %c0_2 = arith.constant 0 : index
    %1 = vector.load %arg3[%c0_1, %c0_2] : memref<128x512xbf16, #tpu.memory_space<vmem>>, vector<128x512xbf16>
    %cst = arith.constant dense<0.000000e+00> : vector<8x512xf32>
    %2 = tpu.matmul %0, %1, %cst {dimension_numbers = #tpu.dot_dimension_numbers<[1], [0], [0], [1], [0, 0, 1, 1], [], []>} : vector<8x128xbf16>, vector<128x512xbf16>, vector<8x512xf32> -> vector<8x512xf32>
    %3 = vector.extract_strided_slice %2 {offsets = [0, 0], sizes = [8, 256], strides = [1, 1]} : vector<8x512xf32> to vector<8x256xf32>
    %4 = vector.extract_strided_slice %2 {offsets = [0, 256], sizes = [8, 256], strides = [1, 1]} : vector<8x512xf32> to vector<8x256xf32>
    %5 = arith.negf %3 : vector<8x256xf32>
    %6 = math.exp %5 : vector<8x256xf32>
    %cst_3 = arith.constant 1.000000e+00 : f32
    %7 = vector.broadcast %cst_3 : f32 to vector<8x256xf32>
    %8 = arith.addf %7, %6 : vector<8x256xf32>
    %9 = arith.divf %7, %8 : vector<8x256xf32>
    %10 = arith.mulf %3, %9 : vector<8x256xf32>
    %11 = arith.mulf %10, %4 : vector<8x256xf32>
    %12 = arith.truncf %11 : vector<8x256xf32> to vector<8x256xbf16>
    %c0_4 = arith.constant 0 : index
    %c0_5 = arith.constant 0 : index
    %13 = vector.load %arg4[%c0_4, %c0_5] : memref<256x128xbf16, #tpu.memory_space<vmem>>, vector<256x128xbf16>
    %cst_6 = arith.constant dense<0.000000e+00> : vector<8x128xf32>
    %14 = tpu.matmul %12, %13, %cst_6 {dimension_numbers = #tpu.dot_dimension_numbers<[1], [0], [0], [1], [0, 0, 1, 1], [], []>} : vector<8x256xbf16>, vector<256x128xbf16>, vector<8x128xf32> -> vector<8x128xf32>
    %c0_7 = arith.constant 0 : index
    %c0_8 = arith.constant 0 : index
    %15 = vector.load %arg5[%c0_7, %c0_8] : memref<8x128xf32, #tpu.memory_space<vmem>>, vector<8x128xf32>
    tpu.vector_store %arg5[%c0_7, %c0_8], %14 {strides = array<i32>} : memref<8x128xf32, #tpu.memory_space<vmem>>, vector<8x128xf32>,
    return
  }
  func.func @transform_0(%arg0: i32, %arg1: i32) -> (i32, i32) {
    %c0_i32 = arith.constant 0 : i32
    %c0_i32_0 = arith.constant 0 : i32
    return %arg0, %c0_i32 : i32, i32
  }
  func.func @transform_1(%arg0: i32, %arg1: i32) -> (i32, i32) {
    %c0_i32 = arith.constant 0 : i32
    %c0_i32_0 = arith.constant 0 : i32
    return %c0_i32, %arg1 : i32, i32
  }
  func.func @transform_2(%arg0: i32, %arg1: i32) -> (i32, i32) {
    %c0_i32 = arith.constant 0 : i32
    %c0_i32_0 = arith.constant 0 : i32
    return %arg1, %c0_i32 : i32, i32
  }
  func.func @transform_3(%arg0: i32, %arg1: i32) -> (i32, i32) {
    %c0_i32 = arith.constant 0 : i32
    %c0_i32_0 = arith.constant 0 : i32
    return %arg0, %c0_i32 : i32, i32
  }
}

</mosaic_0001>

<llo_original>
// kernel: tpu_custom_call.1
$region0: #{tpu_custom_call.1}
  #allocation0 [shape = 'u32[]', space=smem, size = 0x4, offset = 0x4, fixed_abs, tag = 'smem constant byte address 0x4 - core index']
  #allocation1 [shape = 'u32[144,128]{1,0:T(1,128)}', space=vmem, size = 0x12000, scoped, tag = 'internal scratch']
  %s0 = inlined_call_operand.hbm [shape: bf16[16,128], index: 0, kind: input, shape index: {}]
  %s1 = inlined_call_operand.hbm [shape: bf16[128,512], index: 1, kind: input, shape index: {}]
  %s2 = inlined_call_operand.hbm [shape: bf16[256,128], index: 2, kind: input, shape index: {}]
  %s3 = inlined_call_operand.hbm [shape: f32[16,128], index: 3, kind: output, shape index: {}]
  %s4 = sld [smem:[#allocation0]]
  $region57: #{tpu_custom_call.1} parent=0
    _
  %s6 = ssub.s32 1, %s4
  %s7 = scalar_select 0, %s6, %s4
  $region1: #{tpu_custom_call.1} parent=0
    #allocation2 [shape = 'u8[4096]{0}', space=vmem, size = 0x1000, scoped, tag = 'input window, operand 0']
    #allocation3 [shape = 's32[2]{0}', space=sflag, size = 0x8, scoped, tag = 'scoped memory for tpu_custom_call.1']
    #allocation4 [shape = 's32[2]{0}', space=sflag, size = 0x8, scoped, tag = 'scoped memory for tpu_custom_call.1']
    #allocation5 [shape = 'u8[131072]{0}', space=vmem, size = 0x20000, scoped, tag = 'input window, operand 1, single buffered']
    #allocation6 [shape = 's32[1]{0}', space=sflag, size = 0x4, scoped, tag = 'scoped memory for tpu_custom_call.1']
    #allocation7 [shape = 'u8[65536]{0}', space=vmem, size = 0x10000, scoped, tag = 'input window, operand 2, single buffered']
    #allocation8 [shape = 'u8[8192]{0}', space=vmem, size = 0x2000, scoped, tag = 'output window, operand 0']
    %8 = vsyncpa [#allocation3], 0
    %s9 = scalar_lea.sflag [#allocation3], 1
    %10 = vsyncpa %s9, 0
    %11 = vsyncpa [#allocation6], 0
    %12 = vsyncpa [#allocation4], 0
    %s13 = scalar_lea.sflag [#allocation4], 1
    %14 = vsyncpa %s13, 0
    loop: start=0, step=1, limit=4
    $region2: #{tpu_custom_call.1} parent=1 // loop_pre_header
      _
    $region3: #{tpu_custom_call.1} parent=1 // loop_header
      %s16 = sphi 0, %s20
      %p17 = scmp.ge.s32.totalorder %s16, 4
      %s23 = sphi 0, %s35
      %s24 = sphi 0, %s31
      %s25 = sphi 0, %s23
      %s26 = sphi 0, %s24
      %s27 = sphi 0, %s25
      %s28 = sphi 0, %s26
      %s38 = sphi 0, %s40
      %s41 = sphi 0, %s38
      %s42 = sphi 0, %s41
      %s58 = sphi 0, %s42
      %s64 = sphi 0, %s66
      %s67 = sphi 0, %s64
      %s68 = sphi 0, %s67
      %s84 = sphi 0, %s68
      %s90 = sphi 0, %s92
      %s93 = sphi 0, %s90
      %s94 = sphi 0, %s93
      %s110 = sphi 0, %s94
      %s116 = sphi 0, %s118
      %s119 = sphi 0, %s116
      %s120 = sphi 0, %s119
      %s136 = sphi 0, %s120
    $region4: #{tpu_custom_call.1} parent=1 // loop_header_branch
      %19 = sbr.rel (%p17) target = $region8
    $region5: #{tpu_custom_call.1} parent=1 // loop_body
      %s21 = ssub.s32 %s16, 1
      %s22 = ssub.s32 %s16, 2
      %s29 = sadd.s32 1, %s24
      %p30 = scmp.ge.s32.totalorder %s29, 1
      %s31 = scalar_select %p30, 0, %s29
      %s32 = sadd.s32 1, %s23
      %s33 = scalar_select %p30, %s32, %s23
      %p34 = scmp.ge.s32.totalorder %s33, 2
      %s35 = scalar_select %p34, 0, %s33
      %s36 = ssub.s32 %s23, %s35
      %p37 = scmp.eq.s32.totalorder %s36, 0
      %s39 = sadd.s32 %s38, 1
      %s40 = scalar_select %p37, %s38, %s39
      %p43 = pneg %p37
      %p44 = scmp.eq.s32.totalorder %s16, 1
      %p45 = por %p43, %p44
      %p46 = scmp.ne.s32.totalorder %s38, %s41
      %p47 = scmp.eq.s32.totalorder %s16, 0
      %p48 = por %p46, %p47
      %p49 = scmp.ne.s32.totalorder %s38, %s41
      %p50 = scmp.eq.s32.totalorder %s21, 1
      %p51 = por %p49, %p50
      %p52 = scmp.ne.s32.totalorder %s41, %s42
      %p53 = scmp.eq.s32.totalorder %s21, 0
      %p54 = por %p52, %p53
      %p55 = scmp.ne.s32.totalorder %s41, %s42
      %p56 = scmp.eq.s32.totalorder %s22, 1
      %p57 = por %p55, %p56
      %p59 = scmp.ne.s32.totalorder %s42, %s58
      %p60 = scmp.eq.s32.totalorder %s22, 0
      %p61 = por %p59, %p60
      %s62 = ssub.s32 %s24, %s31
      %p63 = scmp.eq.s32.totalorder %s62, 0
      %s65 = sadd.s32 %s64, 1
      %s66 = scalar_select %p63, %s64, %s65
      %p69 = pneg %p63
      %p70 = scmp.eq.s32.totalorder %s16, 1
      %p71 = por %p69, %p70
      %p72 = scmp.ne.s32.totalorder %s64, %s67
      %p73 = scmp.eq.s32.totalorder %s16, 0
      %p74 = por %p72, %p73
      %p75 = scmp.ne.s32.totalorder %s64, %s67
      %p76 = scmp.eq.s32.totalorder %s21, 1
      %p77 = por %p75, %p76
      %p78 = scmp.ne.s32.totalorder %s67, %s68
      %p79 = scmp.eq.s32.totalorder %s21, 0
      %p80 = por %p78, %p79
      %p81 = scmp.ne.s32.totalorder %s67, %s68
      %p82 = scmp.eq.s32.totalorder %s22, 1
      %p83 = por %p81, %p82
      %p85 = scmp.ne.s32.totalorder %s68, %s84
      %p86 = scmp.eq.s32.totalorder %s22, 0
      %p87 = por %p85, %p86
      %s88 = ssub.s32 %s24, %s31
      %p89 = scmp.eq.s32.totalorder %s88, 0
      %s91 = sadd.s32 %s90, 1
      %s92 = scalar_select %p89, %s90, %s91
      %p95 = pneg %p89
      %p96 = scmp.eq.s32.totalorder %s16, 1
      %p97 = por %p95, %p96
      %p98 = scmp.ne.s32.totalorder %s90, %s93
      %p99 = scmp.eq.s32.totalorder %s16, 0
      %p100 = por %p98, %p99
      %p101 = scmp.ne.s32.totalorder %s90, %s93
      %p102 = scmp.eq.s32.totalorder %s21, 1
      %p103 = por %p101, %p102
      %p104 = scmp.ne.s32.totalorder %s93, %s94
      %p105 = scmp.eq.s32.totalorder %s21, 0
      %p106 = por %p104, %p105
      %p107 = scmp.ne.s32.totalorder %s93, %s94
      %p108 = scmp.eq.s32.totalorder %s22, 1
      %p109 = por %p107, %p108
      %p111 = scmp.ne.s32.totalorder %s94, %s110
      %p112 = scmp.eq.s32.totalorder %s22, 0
      %p113 = por %p111, %p112
      %s114 = ssub.s32 %s23, %s35
      %p115 = scmp.eq.s32.totalorder %s114, 0
      %s117 = sadd.s32 %s116, 1
      %s118 = scalar_select %p115, %s116, %s117
      %p121 = pneg %p115
      %p122 = scmp.eq.s32.totalorder %s16, 1
      %p123 = por %p121, %p122
      %p124 = scmp.ne.s32.totalorder %s116, %s119
      %p125 = scmp.eq.s32.totalorder %s16, 0
      %p126 = por %p124, %p125
      %p127 = scmp.ne.s32.totalorder %s116, %s119
      %p128 = scmp.eq.s32.totalorder %s21, 1
      %p129 = por %p127, %p128
      %p130 = scmp.ne.s32.totalorder %s119, %s120
      %p131 = scmp.eq.s32.totalorder %s21, 0
      %p132 = por %p130, %p131
      %p133 = scmp.ne.s32.totalorder %s119, %s120
      %p134 = scmp.eq.s32.totalorder %s22, 1
      %p135 = por %p133, %p134
      %p137 = scmp.ne.s32.totalorder %s120, %s136
      %p138 = scmp.eq.s32.totalorder %s22, 0
      %p139 = por %p137, %p138
      %p140 = scmp.le.s32.totalorder 1, %s16
      %p141 = scmp.lt.s32.totalorder %s16, 3
      %p142 = pnand %p140, %p141
      %p143 = pneg %p142
      // Predicated region
      $region9: #{tpu_custom_call.1} parent=5 // pred_check
        _
      $region10: #{tpu_custom_call.1} parent=5 // pred_check_branch
        %145 = sbr.rel (%p142) target = $region12
      $region11: #{tpu_custom_call.1} parent=5 // pred_region
        %s146 = ssub.s32 %s16, 1
        // Predicated region
        $region13: #{tpu_custom_call.1} parent=11 // pred_check
          %p147 = pneg %p80
        $region14: #{tpu_custom_call.1} parent=11 // pred_check_branch
          %149 = sbr.rel (%p147) target = $region16
        $region15: #{tpu_custom_call.1} parent=11 // pred_region
          %s150 = smul.u32 4, %s26
          %s152 = ssub.s32 4096, 4096
          %153 = vsyncadd [#allocation6], %s152
          %s154 = smul.addr %s150, 64
          %s155 = scalar_lea.hbm %s1, %s154
          %s156 = sshll.u32 [#allocation5], 4
          %s157 = int_to_ptr.vmem [resolvable:$true] %s156
          %162 = dma.hbm_to_vmem [thread:$0]  %s155, 4096, %s157, [#allocation6], 256, 256, 16
        $region16: #{tpu_custom_call.1} parent=11 // pred_fallthru
          _
        // Predicated region
        $region17: #{tpu_custom_call.1} parent=11 // pred_check
          %p163 = pneg %p106
        $region18: #{tpu_custom_call.1} parent=11 // pred_check_branch
          %165 = sbr.rel (%p163) target = $region20
        $region19: #{tpu_custom_call.1} parent=11 // pred_region
          %s166 = smul.u32 32, %s26
          %s168 = ssub.s32 2048, 2048
          %169 = vsyncadd [#allocation6], %s168
          %s170 = smul.addr %s166, 64
          %s171 = scalar_lea.hbm %s2, %s170
          %s172 = sshll.u32 [#allocation7], 4
          %s173 = int_to_ptr.vmem [resolvable:$true] %s172
          %178 = dma.hbm_to_vmem [thread:$0]  %s171, 2048, %s173, [#allocation6], 64, 64, 4
        $region20: #{tpu_custom_call.1} parent=11 // pred_fallthru
          _
      $region12: #{tpu_custom_call.1} parent=5 // pred_fallthru
        _
      %p179 = scmp.lt.s32.totalorder %s16, 2
      // Predicated region
      $region21: #{tpu_custom_call.1} parent=5 // pred_check
        %p180 = pneg %p179
      $region22: #{tpu_custom_call.1} parent=5 // pred_check_branch
        %182 = sbr.rel (%p180) target = $region24
      $region23: #{tpu_custom_call.1} parent=5 // pred_region
        // Predicated region
        $region25: #{tpu_custom_call.1} parent=23 // pred_check
          %p183 = pneg %p48
        $region26: #{tpu_custom_call.1} parent=23 // pred_check_branch
          %185 = sbr.rel (%p183) target = $region28
        $region27: #{tpu_custom_call.1} parent=23 // pred_region
          %s186 = sand.u32 %s38, 1
          %s187 = scalar_lea.sflag [#allocation3], %s186
          %s188 = sand.u32 %s38, 1
          %s189 = smul.addr %s188, 4
          %s190 = scalar_lea.vmem [#allocation2], %s189
          %s192 = ssub.s32 64, 64
          %193 = vsyncadd %s187, %s192
          %s194 = smul.addr %s23, 64
          %s195 = scalar_lea.hbm %s0, %s194
          %s197 = sshll.u32 %s190, 4
          %s198 = int_to_ptr.vmem [resolvable:$true] %s197
          %200 = dma.hbm_to_vmem [thread:$0]  %s195, 64, %s198, %s187
        $region28: #{tpu_custom_call.1} parent=23 // pred_fallthru
          _
      $region24: #{tpu_custom_call.1} parent=5 // pred_fallthru
        _
      %p201 = scmp.le.s32.totalorder 1, %s16
      %p202 = scmp.lt.s32.totalorder %s16, 3
      %p203 = pnand %p201, %p202
      %p204 = pneg %p203
      // Predicated region
      $region29: #{tpu_custom_call.1} parent=5 // pred_check
        _
      $region30: #{tpu_custom_call.1} parent=5 // pred_check_branch
        %206 = sbr.rel (%p203) target = $region32
      $region31: #{tpu_custom_call.1} parent=5 // pred_region
        %s207 = ssub.s32 %s16, 1
        %s208 = sand.u32 %s41, 1
        %s209 = scalar_lea.sflag [#allocation3], %s208
        %s210 = sand.u32 %s41, 1
        %s211 = smul.addr %s210, 4
        %s212 = scalar_lea.vmem [#allocation2], %s211
        // Predicated region
        $region33: #{tpu_custom_call.1} parent=31 // pred_check
          %p213 = pneg %p54
        $region34: #{tpu_custom_call.1} parent=31 // pred_check_branch
          %215 = sbr.rel (%p213) target = $region36
        $region35: #{tpu_custom_call.1} parent=31 // pred_region
          %216 = dma.done %s209, 64
        $region36: #{tpu_custom_call.1} parent=31 // pred_fallthru
          _
        // Predicated region
        $region37: #{tpu_custom_call.1} parent=31 // pred_check
          %p217 = pneg %p80
        $region38: #{tpu_custom_call.1} parent=31 // pred_check_branch
          %219 = sbr.rel (%p217) target = $region40
        $region39: #{tpu_custom_call.1} parent=31 // pred_region
          %220 = dma.done [#allocation6], 4096
        $region40: #{tpu_custom_call.1} parent=31 // pred_fallthru
          _
        // Predicated region
        $region41: #{tpu_custom_call.1} parent=31 // pred_check
          %p221 = pneg %p106
        $region42: #{tpu_custom_call.1} parent=31 // pred_check_branch
          %223 = sbr.rel (%p221) target = $region44
        $region43: #{tpu_custom_call.1} parent=31 // pred_region
          %224 = dma.done [#allocation6], 2048
        $region44: #{tpu_custom_call.1} parent=31 // pred_fallthru
          _
        %s225 = sand.u32 %s41, 1
        %s226 = scalar_lea.sflag [#allocation3], %s225
        %s227 = sand.u32 %s41, 1
        %s228 = smul.addr %s227, 4
        %s229 = scalar_lea.vmem [#allocation2], %s228
        %p230 = pneg %p54
        %p231 = pneg %p51
        %p232 = pneg %p80
        %p233 = pneg %p77
        %p234 = pneg %p106
        %p235 = pneg %p103
        %p236 = pneg %p132
        %p237 = pneg %p129
        %s238 = sand.u32 %s119, 1
        %s239 = scalar_lea.sflag [#allocation4], %s238
        %s240 = sand.u32 %s119, 1
        %s241 = smul.addr %s240, 8
        %s242 = scalar_lea.vmem [#allocation8], %s241
        %s243 = smul.u32 4, %s26
        %s244 = smul.u32 32, %s26
        %v246 = vld [vmem:[%s212] sm:$0xf]
        %v247 = vld [vmem:[#allocation5] sm:$0xff]
        %v248 = vld [vmem:[#allocation5 + $0x8] sm:$0xff]
        %v249 = vld [vmem:[#allocation5 + $0x10] sm:$0xff]
        %v250 = vld [vmem:[#allocation5 + $0x18] sm:$0xff]
        %v251 = vld [vmem:[#allocation5 + $0x20] sm:$0xff]
        %v252 = vld [vmem:[#allocation5 + $0x28] sm:$0xff]
        %v253 = vld [vmem:[#allocation5 + $0x30] sm:$0xff]
        %v254 = vld [vmem:[#allocation5 + $0x38] sm:$0xff]
        %v255 = vld [vmem:[#allocation5 + $0x40] sm:$0xff]
        %v256 = vld [vmem:[#allocation5 + $0x48] sm:$0xff]
        %v257 = vld [vmem:[#allocation5 + $0x50] sm:$0xff]
        %v258 = vld [vmem:[#allocation5 + $0x58] sm:$0xff]
        %v259 = vld [vmem:[#allocation5 + $0x60] sm:$0xff]
        %v260 = vld [vmem:[#allocation5 + $0x68] sm:$0xff]
        %v261 = vld [vmem:[#allocation5 + $0x70] sm:$0xff]
        %v262 = vld [vmem:[#allocation5 + $0x78] sm:$0xff]
        %v263 = vld [vmem:[#allocation5 + $0x80] sm:$0xff]
        %v264 = vld [vmem:[#allocation5 + $0x88] sm:$0xff]
        %v265 = vld [vmem:[#allocation5 + $0x90] sm:$0xff]
        %v266 = vld [vmem:[#allocation5 + $0x98] sm:$0xff]
        %v267 = vld [vmem:[#allocation5 + $0xa0] sm:$0xff]
        %v268 = vld [vmem:[#allocation5 + $0xa8] sm:$0xff]
        %v269 = vld [vmem:[#allocation5 + $0xb0] sm:$0xff]
        %v270 = vld [vmem:[#allocation5 + $0xb8] sm:$0xff]
        %v271 = vld [vmem:[#allocation5 + $0xc0] sm:$0xff]
        %v272 = vld [vmem:[#allocation5 + $0xc8] sm:$0xff]
        %v273 = vld [vmem:[#allocation5 + $0xd0] sm:$0xff]
        %v274 = vld [vmem:[#allocation5 + $0xd8] sm:$0xff]
        %v275 = vld [vmem:[#allocation5 + $0xe0] sm:$0xff]
        %v276 = vld [vmem:[#allocation5 + $0xe8] sm:$0xff]
        %v277 = vld [vmem:[#allocation5 + $0xf0] sm:$0xff]
        %v278 = vld [vmem:[#allocation5 + $0xf8] sm:$0xff]
        %v311 = vunpack.c.l.b16 %v247
        %v312 = vunpack.c.h.b16 %v247
        %v313 = vunpack.c.l.b16 %v248
        %v314 = vunpack.c.h.b16 %v248
        %v315 = vunpack.c.l.b16 %v249
        %v316 = vunpack.c.h.b16 %v249
        %v317 = vunpack.c.l.b16 %v250
        %v318 = vunpack.c.h.b16 %v250
        %v319 = vunpack.c.l.b16 %v251
        %v320 = vunpack.c.h.b16 %v251
        %v321 = vunpack.c.l.b16 %v252
        %v322 = vunpack.c.h.b16 %v252
        %v323 = vunpack.c.l.b16 %v253
        %v324 = vunpack.c.h.b16 %v253
        %v325 = vunpack.c.l.b16 %v254
        %v326 = vunpack.c.h.b16 %v254
        %v327 = vunpack.c.l.b16 %v255
        %v328 = vunpack.c.h.b16 %v255
        %v329 = vunpack.c.l.b16 %v256
        %v330 = vunpack.c.h.b16 %v256
        %v331 = vunpack.c.l.b16 %v257
        %v332 = vunpack.c.h.b16 %v257
        %v333 = vunpack.c.l.b16 %v258
        %v334 = vunpack.c.h.b16 %v258
        %v335 = vunpack.c.l.b16 %v259
        %v336 = vunpack.c.h.b16 %v259
        %v337 = vunpack.c.l.b16 %v260
        %v338 = vunpack.c.h.b16 %v260
        %v339 = vunpack.c.l.b16 %v261
        %v340 = vunpack.c.h.b16 %v261
        %v341 = vunpack.c.l.b16 %v262
        %v342 = vunpack.c.h.b16 %v262
        %v343 = vunpack.c.l.b16 %v263
        %v344 = vunpack.c.h.b16 %v263
        %v345 = vunpack.c.l.b16 %v264
        %v346 = vunpack.c.h.b16 %v264
        %v347 = vunpack.c.l.b16 %v265
        %v348 = vunpack.c.h.b16 %v265
        %v349 = vunpack.c.l.b16 %v266
        %v350 = vunpack.c.h.b16 %v266
        %v351 = vunpack.c.l.b16 %v267
        %v352 = vunpack.c.h.b16 %v267
        %v353 = vunpack.c.l.b16 %v268
        %v354 = vunpack.c.h.b16 %v268
        %v355 = vunpack.c.l.b16 %v269
        %v356 = vunpack.c.h.b16 %v269
        %v357 = vunpack.c.l.b16 %v270
        %v358 = vunpack.c.h.b16 %v270
        %v359 = vunpack.c.l.b16 %v271
        %v360 = vunpack.c.h.b16 %v271
        %v361 = vunpack.c.l.b16 %v272
        %v362 = vunpack.c.h.b16 %v272
        %v363 = vunpack.c.l.b16 %v273
        %v364 = vunpack.c.h.b16 %v273
        %v365 = vunpack.c.l.b16 %v274
        %v366 = vunpack.c.h.b16 %v274
        %v367 = vunpack.c.l.b16 %v275
        %v368 = vunpack.c.h.b16 %v275
        %v369 = vunpack.c.l.b16 %v276
        %v370 = vunpack.c.h.b16 %v276
        %v371 = vunpack.c.l.b16 %v277
        %v372 = vunpack.c.h.b16 %v277
        %v373 = vunpack.c.l.b16 %v278
        %v374 = vunpack.c.h.b16 %v278
        %v375 = vpack.c.b16 %v315, %v311
        %v376 = vpack.c.b16 %v316, %v312
        %v377 = vpack.c.b16 %v317, %v313
        %v378 = vpack.c.b16 %v318, %v314
        %v379 = vpack.c.b16 %v323, %v319
        %v380 = vpack.c.b16 %v324, %v320
        %v381 = vpack.c.b16 %v325, %v321
        %v382 = vpack.c.b16 %v326, %v322
        %v383 = vpack.c.b16 %v331, %v327
        %v384 = vpack.c.b16 %v332, %v328
        %v385 = vpack.c.b16 %v333, %v329
        %v386 = vpack.c.b16 %v334, %v330
        %v387 = vpack.c.b16 %v339, %v335
        %v388 = vpack.c.b16 %v340, %v336
        %v389 = vpack.c.b16 %v341, %v337
        %v390 = vpack.c.b16 %v342, %v338
        %v391 = vpack.c.b16 %v347, %v343
        %v392 = vpack.c.b16 %v348, %v344
        %v393 = vpack.c.b16 %v349, %v345
        %v394 = vpack.c.b16 %v350, %v346
        %v395 = vpack.c.b16 %v355, %v351
        %v396 = vpack.c.b16 %v356, %v352
        %v397 = vpack.c.b16 %v357, %v353
        %v398 = vpack.c.b16 %v358, %v354
        %v399 = vpack.c.b16 %v363, %v359
        %v400 = vpack.c.b16 %v364, %v360
        %v401 = vpack.c.b16 %v365, %v361
        %v402 = vpack.c.b16 %v366, %v362
        %v403 = vpack.c.b16 %v371, %v367
        %v404 = vpack.c.b16 %v372, %v368
        %v405 = vpack.c.b16 %v373, %v369
        %v406 = vpack.c.b16 %v374, %v370
        %439 = vmatprep.subr.bf16.mxu0 %v404
        %440 = vmatpush1.bf16.msra.mxu0 %v403
        %441 = vmatprep.subr.bf16.mxu0 %v400
        %442 = vmatpush1.bf16.msra.mxu0 %v399
        %443 = vmatprep.subr.bf16.mxu0 %v396
        %444 = vmatpush1.bf16.msra.mxu0 %v395
        %445 = vmatprep.subr.bf16.mxu0 %v392
        %446 = vmatpush1.bf16.msra.mxu0 %v391
        %447 = vmatprep.subr.bf16.mxu0 %v388
        %448 = vmatpush1.bf16.msra.mxu0 %v387
        %449 = vmatprep.subr.bf16.mxu0 %v384
        %450 = vmatpush1.bf16.msra.mxu0 %v383
        %451 = vmatprep.subr.bf16.mxu0 %v380
        %452 = vmatpush1.bf16.msra.mxu0 %v379
        %453 = vmatprep.subr.bf16.mxu0 %v376
        %454 = vmatpush1.bf16.msra.mxu0 %v375
        %455 = vmatprep.subr.bf16.mxu0 0
        %456 = vmatpush2.bf16.msra.mxu0 0
        %457 = vmatprep.subr.bf16.mxu0 0
        %458 = vmatpush2.bf16.msra.mxu0 0
        %459 = vmatprep.subr.bf16.mxu0 0
        %460 = vmatpush2.bf16.msra.mxu0 0
        %461 = vmatprep.subr.bf16.mxu0 0
        %462 = vmatpush2.bf16.msra.mxu0 0
        %463 = vmatprep.subr.bf16.mxu0 0
        %464 = vmatpush2.bf16.msra.mxu0 0
        %465 = vmatprep.subr.bf16.mxu0 0
        %466 = vmatpush2.bf16.msra.mxu0 0
        %467 = vmatprep.subr.bf16.mxu0 0
        %468 = vmatpush2.bf16.msra.mxu0 0
        %469 = vmatprep.subr.bf16.mxu0 0
        %470 = vmatpush2.bf16.msra.mxu0 0
        %471 = vmatprep.mubr.bf16.mxu0 0
        %472 = vmatmul.mubr.bf16.gmra.mxu0 %v246
        %v473 = vpop.f32.mrf.mxu0
        %v474 = vadd.f32 0.0, %v473
        %v475 = vpop.f32.mrf.mxu0
        %v476 = vadd.f32 0.0, %v475
        %v477 = vpop.f32.mrf.mxu0
        %v478 = vpop.f32.mrf.mxu0
        %479 = vdwg.mxu0
        %480 = vmatprep.subr.bf16.mxu0 %v406
        %481 = vmatpush1.bf16.msra.mxu0 %v405
        %482 = vmatprep.subr.bf16.mxu0 %v402
        %483 = vmatpush1.bf16.msra.mxu0 %v401
        %484 = vmatprep.subr.bf16.mxu0 %v398
        %485 = vmatpush1.bf16.msra.mxu0 %v397
        %486 = vmatprep.subr.bf16.mxu0 %v394
        %487 = vmatpush1.bf16.msra.mxu0 %v393
        %488 = vmatprep.subr.bf16.mxu0 %v390
        %489 = vmatpush1.bf16.msra.mxu0 %v389
        %490 = vmatprep.subr.bf16.mxu0 %v386
        %491 = vmatpush1.bf16.msra.mxu0 %v385
        %492 = vmatprep.subr.bf16.mxu0 %v382
        %493 = vmatpush1.bf16.msra.mxu0 %v381
        %494 = vmatprep.subr.bf16.mxu0 %v378
        %495 = vmatpush1.bf16.msra.mxu0 %v377
        %496 = vmatprep.subr.bf16.mxu0 0
        %497 = vmatpush2.bf16.msra.mxu0 0
        %498 = vmatprep.subr.bf16.mxu0 0
        %499 = vmatpush2.bf16.msra.mxu0 0
        %500 = vmatprep.subr.bf16.mxu0 0
        %501 = vmatpush2.bf16.msra.mxu0 0
        %502 = vmatprep.subr.bf16.mxu0 0
        %503 = vmatpush2.bf16.msra.mxu0 0
        %504 = vmatprep.subr.bf16.mxu0 0
        %505 = vmatpush2.bf16.msra.mxu0 0
        %506 = vmatprep.subr.bf16.mxu0 0
        %507 = vmatpush2.bf16.msra.mxu0 0
        %508 = vmatprep.subr.bf16.mxu0 0
        %509 = vmatpush2.bf16.msra.mxu0 0
        %510 = vmatprep.subr.bf16.mxu0 0
        %511 = vmatpush2.bf16.msra.mxu0 0
        %512 = vmatprep.mubr.bf16.mxu0 0
        %513 = vmatmul.mubr.bf16.gmra.mxu0 %v246
        %v514 = vpop.f32.mrf.mxu0
        %v515 = vadd.f32 0.0, %v514
        %v516 = vpop.f32.mrf.mxu0
        %v517 = vadd.f32 0.0, %v516
        %v518 = vpop.f32.mrf.mxu0
        %v519 = vpop.f32.mrf.mxu0
        %520 = vdwg.mxu0
        %v521 = vxor.u32 %v474, 2147483648
        %v522 = vxor.u32 %v476, 2147483648
        %v523 = vmul.f32 %v521, 1.442695
        %v524 = vpow.pop %v523
        %v525 = vmul.f32 %v522, 1.442695
        %v526 = vpow.pop %v525
        %v527 = vadd.f32 %v524, 1.0
        %v528 = vadd.f32 %v526, 1.0
        %v529 = vrcp.pop %v527
        %v530 = vmul.f32 1.0, %v529
        %v531 = vrcp.pop %v528
        %v532 = vmul.f32 1.0, %v531
        %v533 = vmul.f32 %v474, %v530
        %v534 = vmul.f32 %v476, %v532
        %v535 = vmul.f32 %v533, %v515
        %v536 = vmul.f32 %v534, %v517
        %v537 = vpack.c.bf16 %v535, %v535
        %v538 = vpack.c.bf16 %v536, %v536
        %v539 = vld [vmem:[#allocation7] sm:$0xf]
        %v540 = vld [vmem:[#allocation7 + $0x4] sm:$0xf]
        %v541 = vld [vmem:[#allocation7 + $0x8] sm:$0xf]
        %v542 = vld [vmem:[#allocation7 + $0xc] sm:$0xf]
        %v543 = vld [vmem:[#allocation7 + $0x10] sm:$0xf]
        %v544 = vld [vmem:[#allocation7 + $0x14] sm:$0xf]
        %v545 = vld [vmem:[#allocation7 + $0x18] sm:$0xf]
        %v546 = vld [vmem:[#allocation7 + $0x1c] sm:$0xf]
        %v547 = vld [vmem:[#allocation7 + $0x20] sm:$0xf]
        %v548 = vld [vmem:[#allocation7 + $0x24] sm:$0xf]
        %v549 = vld [vmem:[#allocation7 + $0x28] sm:$0xf]
        %v550 = vld [vmem:[#allocation7 + $0x2c] sm:$0xf]
        %v551 = vld [vmem:[#allocation7 + $0x30] sm:$0xf]
        %v552 = vld [vmem:[#allocation7 + $0x34] sm:$0xf]
        %v553 = vld [vmem:[#allocation7 + $0x38] sm:$0xf]
        %v554 = vld [vmem:[#allocation7 + $0x3c] sm:$0xf]
        %v555 = vld [vmem:[#allocation7 + $0x40] sm:$0xf]
        %v556 = vld [vmem:[#allocation7 + $0x44] sm:$0xf]
        %v557 = vld [vmem:[#allocation7 + $0x48] sm:$0xf]
        %v558 = vld [vmem:[#allocation7 + $0x4c] sm:$0xf]
        %v559 = vld [vmem:[#allocation7 + $0x50] sm:$0xf]
        %v560 = vld [vmem:[#allocation7 + $0x54] sm:$0xf]
        %v561 = vld [vmem:[#allocation7 + $0x58] sm:$0xf]
        %v562 = vld [vmem:[#allocation7 + $0x5c] sm:$0xf]
        %v563 = vld [vmem:[#allocation7 + $0x60] sm:$0xf]
        %v564 = vld [vmem:[#allocation7 + $0x64] sm:$0xf]
        %v565 = vld [vmem:[#allocation7 + $0x68] sm:$0xf]
        %v566 = vld [vmem:[#allocation7 + $0x6c] sm:$0xf]
        %v567 = vld [vmem:[#allocation7 + $0x70] sm:$0xf]
        %v568 = vld [vmem:[#allocation7 + $0x74] sm:$0xf]
        %v569 = vld [vmem:[#allocation7 + $0x78] sm:$0xf]
        %v570 = vld [vmem:[#allocation7 + $0x7c] sm:$0xf]
        %v603 = vunpack.c.l.b16 %v539
        %v604 = vunpack.c.l.b16 %v540
        %v605 = vunpack.c.l.b16 %v541
        %v606 = vunpack.c.l.b16 %v542
        %v607 = vunpack.c.l.b16 %v543
        %v608 = vunpack.c.l.b16 %v544
        %v609 = vunpack.c.l.b16 %v545
        %v610 = vunpack.c.l.b16 %v546
        %v611 = vunpack.c.l.b16 %v547
        %v612 = vunpack.c.l.b16 %v548
        %v613 = vunpack.c.l.b16 %v549
        %v614 = vunpack.c.l.b16 %v550
        %v615 = vunpack.c.l.b16 %v551
        %v616 = vunpack.c.l.b16 %v552
        %v617 = vunpack.c.l.b16 %v553
        %v618 = vunpack.c.l.b16 %v554
        %v619 = vunpack.c.l.b16 %v555
        %v620 = vunpack.c.l.b16 %v556
        %v621 = vunpack.c.l.b16 %v557
        %v622 = vunpack.c.l.b16 %v558
        %v623 = vunpack.c.l.b16 %v559
        %v624 = vunpack.c.l.b16 %v560
        %v625 = vunpack.c.l.b16 %v561
        %v626 = vunpack.c.l.b16 %v562
        %v627 = vunpack.c.l.b16 %v563
        %v628 = vunpack.c.l.b16 %v564
        %v629 = vunpack.c.l.b16 %v565
        %v630 = vunpack.c.l.b16 %v566
        %v631 = vunpack.c.l.b16 %v567
        %v632 = vunpack.c.l.b16 %v568
        %v633 = vunpack.c.l.b16 %v569
        %v634 = vunpack.c.l.b16 %v570
        %v635 = vpack.c.b16 %v604, %v603
        %v636 = vpack.c.b16 %v606, %v605
        %v637 = vpack.c.b16 %v608, %v607
        %v638 = vpack.c.b16 %v610, %v609
        %v639 = vpack.c.b16 %v612, %v611
        %v640 = vpack.c.b16 %v614, %v613
        %v641 = vpack.c.b16 %v616, %v615
        %v642 = vpack.c.b16 %v618, %v617
        %v643 = vpack.c.b16 %v620, %v619
        %v644 = vpack.c.b16 %v622, %v621
        %v645 = vpack.c.b16 %v624, %v623
        %v646 = vpack.c.b16 %v626, %v625
        %v647 = vpack.c.b16 %v628, %v627
        %v648 = vpack.c.b16 %v630, %v629
        %v649 = vpack.c.b16 %v632, %v631
        %v650 = vpack.c.b16 %v634, %v633
        %667 = vmatprep.subr.bf16.mxu0 0
        %668 = vmatpush1.bf16.msra.mxu0 %v642
        %669 = vmatprep.subr.bf16.mxu0 0
        %670 = vmatpush1.bf16.msra.mxu0 %v641
        %671 = vmatprep.subr.bf16.mxu0 0
        %672 = vmatpush1.bf16.msra.mxu0 %v640
        %673 = vmatprep.subr.bf16.mxu0 0
        %674 = vmatpush1.bf16.msra.mxu0 %v639
        %675 = vmatprep.subr.bf16.mxu0 0
        %676 = vmatpush1.bf16.msra.mxu0 %v638
        %677 = vmatprep.subr.bf16.mxu0 0
        %678 = vmatpush1.bf16.msra.mxu0 %v637
        %679 = vmatprep.subr.bf16.mxu0 0
        %680 = vmatpush1.bf16.msra.mxu0 %v636
        %681 = vmatprep.subr.bf16.mxu0 0
        %682 = vmatpush1.bf16.msra.mxu0 %v635
        %683 = vmatprep.subr.bf16.mxu0 0
        %684 = vmatpush2.bf16.msra.mxu0 %v650
        %685 = vmatprep.subr.bf16.mxu0 0
        %686 = vmatpush2.bf16.msra.mxu0 %v649
        %687 = vmatprep.subr.bf16.mxu0 0
        %688 = vmatpush2.bf16.msra.mxu0 %v648
        %689 = vmatprep.subr.bf16.mxu0 0
        %690 = vmatpush2.bf16.msra.mxu0 %v647
        %691 = vmatprep.subr.bf16.mxu0 0
        %692 = vmatpush2.bf16.msra.mxu0 %v646
        %693 = vmatprep.subr.bf16.mxu0 0
        %694 = vmatpush2.bf16.msra.mxu0 %v645
        %695 = vmatprep.subr.bf16.mxu0 0
        %696 = vmatpush2.bf16.msra.mxu0 %v644
        %697 = vmatprep.subr.bf16.mxu0 0
        %698 = vmatpush2.bf16.msra.mxu0 %v643
        %699 = vmatprep.mubr.bf16.mxu0 %v538
        %700 = vmatmul.mubr.bf16.gmra.mxu0 %v537
        %v701 = vpop.f32.mrf.mxu0
        %v702 = vadd.f32 0.0, %v701
        %v703 = vpop.f32.mrf.mxu0
        %v704 = vpop.f32.mrf.mxu0
        %v705 = vpop.f32.mrf.mxu0
        %706 = vdwg.mxu0
        %707 = vst [vmem:[%s242] sm:$0xff] %v702
        %s708 = sand.u32 %s119, 1
        %s709 = scalar_lea.sflag [#allocation4], %s708
        %s710 = sand.u32 %s119, 1
        %s711 = smul.addr %s710, 8
        %s712 = scalar_lea.vmem [#allocation8], %s711
        // Predicated region
        $region45: #{tpu_custom_call.1} parent=31 // pred_check
          %p713 = pneg %p129
        $region46: #{tpu_custom_call.1} parent=31 // pred_check_branch
          %715 = sbr.rel (%p713) target = $region48
        $region47: #{tpu_custom_call.1} parent=31 // pred_region
          %s717 = ssub.s32 128, 128
          %718 = vsyncadd %s709, %s717
          %s719 = smul.addr %s25, 128
          %s720 = scalar_lea.hbm %s3, %s719
          %s722 = sshll.u32 %s712, 4
          %s723 = int_to_ptr.vmem [resolvable:$true] %s722
          %725 = dma.vmem_to_hbm [thread:$0]  %s723, 128, %s720, %s709
        $region48: #{tpu_custom_call.1} parent=31 // pred_fallthru
          _
      $region32: #{tpu_custom_call.1} parent=5 // pred_fallthru
        _
      %p726 = scmp.le.s32.totalorder 2, %s16
      // Predicated region
      $region49: #{tpu_custom_call.1} parent=5 // pred_check
        %p727 = pneg %p726
      $region50: #{tpu_custom_call.1} parent=5 // pred_check_branch
        %729 = sbr.rel (%p727) target = $region52
      $region51: #{tpu_custom_call.1} parent=5 // pred_region
        %s730 = ssub.s32 %s16, 2
        // Predicated region
        $region53: #{tpu_custom_call.1} parent=51 // pred_check
          %p731 = pneg %p135
        $region54: #{tpu_custom_call.1} parent=51 // pred_check_branch
          %733 = sbr.rel (%p731) target = $region56
        $region55: #{tpu_custom_call.1} parent=51 // pred_region
          %s734 = sand.u32 %s120, 1
          %s735 = scalar_lea.sflag [#allocation4], %s734
          %s736 = sand.u32 %s120, 1
          %s737 = smul.addr %s736, 8
          %s738 = scalar_lea.vmem [#allocation8], %s737
          %739 = dma.done %s735, 128
        $region56: #{tpu_custom_call.1} parent=51 // pred_fallthru
          _
      $region52: #{tpu_custom_call.1} parent=5 // pred_fallthru
        _
    $region6: #{tpu_custom_call.1} parent=1 // loop_footer
      %s20 = sadd.s32 1, %s16
    $region7: #{tpu_custom_call.1} parent=1 // loop_footer_branch
      %15 = sbr.rel target = $region3
    $region8: #{tpu_custom_call.1} parent=1 // loop_exit
      _
    %740 = vsyncpa [#allocation3], 1
    %s741 = scalar_lea.sflag [#allocation3], 1
    %742 = vsyncpa %s741, 1
    %743 = vsyncpa [#allocation6], 1
    %744 = vsyncpa [#allocation4], 1
    %s745 = scalar_lea.sflag [#allocation4], 1
    %746 = vsyncpa %s745, 1

</llo_original>
